<compile_context>
chip_gen: v6e
topology: v6e:2x2x1
jax: 0.10.0
libtpu: 0.0.40
codegen_flags: <defaults>
</compile_context>

<pallas_src>
import numpy as np
import jax
import jax.numpy as jnp
from jax.experimental import pallas as pl
from jax.experimental.pallas import tpu as pltpu

_H1, _H2 = 512, 256
_VMEM_BUDGET = 24 * 1024 * 1024   # conservative: fits v7x 32MiB scoped default


def _round_up(x, m):
    return ((x + m - 1) // m) * m


def _cdiv(a, b):
    return (a + b - 1) // b


def _vmem_bytes(tb, K):
    # Double-buffered batch-tiled f32 inputs + resident bf16 weights + f32
    # biases + in-kernel intermediates (rough upper bound).
    inputs = 2 * (3 * tb * K * 4 + tb * 4)
    weights = (K * _H1 + _H1 * _H2) * 2 + (_H1 + 2 * _H2 + 1) * 4
    interm = tb * K * 2 + tb * _H1 * (4 + 2) + tb * _H2 * 4
    out = 2 * tb * 4
    return inputs + weights + interm + out


def _num_tensorcores_per_chip():
    try:
        kind = jax.devices()[0].device_kind.lower()
    except Exception:
        return 1
    # v7x (and v4 megacore) expose 2 TensorCores per chip.
    return 2 if ("v7" in kind or "v4" in kind) else 1


# -----------------------------------------------------------------------------
# Fused prednet kernel: mix + 3x PosLinear (+ sigmoids) for one batch tile.
# -----------------------------------------------------------------------------
def _ncdnet_kernel(kp_ref, stu_ref, kdiff_ref, ediff_ref,
                   w1_ref, b1_ref, w2_ref, b2_ref, w3_ref, b3_ref,
                   out_ref):
    # Interaction layer (VPU + small EUP).
    stat = jax.nn.sigmoid(stu_ref[...])                       # (tb, K)
    kd = jax.nn.sigmoid(kdiff_ref[...])                        # (tb, K)
    ed = jax.nn.sigmoid(ediff_ref[...])                        # (tb, 1) lane bcast
    x = (kp_ref[...] * (stat - kd) * ed).astype(jnp.bfloat16)  # (tb, K) bf16

    # PosLinear layers: weights arrive pre-|W|'d in bf16 and stay VMEM-resident
    # across tiles.  bf16 MXU inputs, f32 accumulation.  The big activations use
    # sigmoid(z) == 0.5*tanh(0.5*z)+0.5 -> single EUP op per element.
    z1 = jnp.dot(x, w1_ref[...], preferred_element_type=jnp.float32) + b1_ref[...]
    h1 = 0.5 * jnp.tanh(0.5 * z1) + 0.5                        # (tb, 512) f32
    z2 = jnp.dot(h1.astype(jnp.bfloat16), w2_ref[...],
                 preferred_element_type=jnp.float32) + b2_ref[...]
    h2 = 0.5 * jnp.tanh(0.5 * z2) + 0.5                        # (tb, 256) f32

    # Final 256 -> 1 layer: VPU broadcast-multiply + cross-lane reduce instead
    # of a 1-column MXU matmul.
    logit = jnp.sum(h2 * w3_ref[...], axis=1, keepdims=True) + b3_ref[...]
    out_ref[...] = jax.nn.sigmoid(logit)                       # (tb, 1)
    # TODO(synk): Dropout(p=0.5) eval-mode identity (no training-mode masking).


def ncdnet_forward(params, stu_id, input_exercise, input_knowledge_point, *, tb=1024):
    """Returns output_1.view(-1) of shape (B,)."""
    # Embedding gathers stay as XLA glue (dynamic row gather).
    stu_emb = params["student_emb"][stu_id]                    # (B, K) f32
    kdiff = params["k_diff_emb"][input_exercise]               # (B, K) f32
    ediff = params["e_diff_emb"][input_exercise]               # (B, 1) f32
    kp = input_knowledge_point.astype(jnp.float32)             # (B, K)

    # PosLinear |W| (== 2*relu(-W)+W) hoisted out of the kernel; bf16 MXU feeds.
    w1 = jnp.abs(params["pred_w1"]).astype(jnp.bfloat16)       # (K, 512)
    w2 = jnp.abs(params["pred_w2"]).astype(jnp.bfloat16)       # (512, 256)
    w3 = jnp.abs(params["pred_w3_row"])                        # (1, 256) f32 (VPU)

    B, K = stu_emb.shape

    # Pad only to a sublane multiple (8); partial edge blocks are fine because
    # rows are independent and padded-row outputs are sliced away.
    B8 = _round_up(B, 8)
    pad = B8 - B
    if pad:
        stu_emb = jnp.pad(stu_emb, ((0, pad), (0, 0)))
        kdiff = jnp.pad(kdiff, ((0, pad), (0, 0)))
        ediff = jnp.pad(ediff, ((0, pad), (0, 0)))
        kp = jnp.pad(kp, ((0, pad), (0, 0)))

    # Batch-tile selection: as large as the VMEM budget allows; keep >= 2 grid
    # steps on dual-TensorCore chips (v7x) so "parallel" can shard the batch.
    tb = _round_up(max(8, min(tb, B8)), 8)
    while _vmem_bytes(tb, K) > _VMEM_BUDGET and tb > 8:
        tb = max(8, _round_up(tb // 2, 8))
    if _num_tensorcores_per_chip() >= 2 and B8 >= 16:
        tb = min(tb, _round_up(_cdiv(B8, 2), 8))

    grid = (_cdiv(B8, tb),)

    row_spec_K = pl.BlockSpec((tb, K), lambda i: (i, 0))       # batch-tiled rows
    row_spec_1 = pl.BlockSpec((tb, 1), lambda i: (i, 0))

    def w_spec(shape):
        # Constant block index => weights DMA'd once, VMEM-resident across tiles.
        return pl.BlockSpec(shape, lambda i: (0, 0))

    out = pl.pallas_call(
        _ncdnet_kernel,
        out_shape=jax.ShapeDtypeStruct((B8, 1), jnp.float32),
        grid_spec=pltpu.PrefetchScalarGridSpec(
            num_scalar_prefetch=0,
            grid=grid,
            in_specs=[row_spec_K, row_spec_K, row_spec_K, row_spec_1,
                      w_spec((K, _H1)), w_spec((1, _H1)),
                      w_spec((_H1, _H2)), w_spec((1, _H2)),
                      w_spec((1, _H2)), w_spec((1, 1))],
            out_specs=row_spec_1,
        ),
        compiler_params=pltpu.CompilerParams(
            dimension_semantics=("parallel",),
            vmem_limit_bytes=32 * 1024 * 1024),
    )(kp, stu_emb, kdiff, ediff,
      w1, params["pred_b1"], w2, params["pred_b2"], w3, params["pred_b3"])

    return out[:B, 0]


# -----------------------------------------------------------------------------
# Parameter construction matching the module's __init__ (eval-relevant subset).
# -----------------------------------------------------------------------------
def _xavier_normal(key, torch_shape):
    fan_out, fan_in = torch_shape          # torch layout: (out, in) / (num, dim)
    std = float(np.sqrt(2.0 / (fan_in + fan_out)))
    return (std * jax.random.normal(key, torch_shape)).astype(jnp.float32)


def _linear_bias(key, fan_in, out_features):
    bound = 1.0 / float(np.sqrt(fan_in))
    return jax.random.uniform(key, (1, out_features), jnp.float32, -bound, bound)


def init_params(key, knowledge_n, exer_n, student_n):
    K = knowledge_n
    ks = jax.random.split(key, 9)
    return {
        # Embeddings (their "weight" params are xavier_normal'd by the init loop).
        "student_emb": _xavier_normal(ks[0], (student_n, K)),
        "k_diff_emb": _xavier_normal(ks[1], (exer_n, K)),
        "e_diff_emb": _xavier_normal(ks[2], (exer_n, 1)),
        # PosLinear prednet; weights stored pre-transposed as [in, out].
        "pred_w1": _xavier_normal(ks[3], (512, K)).T,
        "pred_b1": _linear_bias(ks[4], K, 512),
        "pred_w2": _xavier_normal(ks[5], (256, 512)).T,
        "pred_b2": _linear_bias(ks[6], 512, 256),
        # Final layer kept as a (1, 256) row (used as VPU broadcast multiply).
        "pred_w3_row": _xavier_normal(ks[7], (1, 256)),
        "pred_b3": _linear_bias(ks[8], 256, 1),
    }


# -----------------------------------------------------------------------------
# Pure-JAX f32 reference (for correctness check).
# -----------------------------------------------------------------------------
def ncdnet_reference(params, stu_id, input_exercise, kp):
    stat = jax.nn.sigmoid(params["student_emb"][stu_id])
    kd = jax.nn.sigmoid(params["k_diff_emb"][input_exercise])
    ed = jax.nn.sigmoid(params["e_diff_emb"][input_exercise])
    x = kp.astype(jnp.float32) * (stat - kd) * ed
    hp = jax.lax.Precision.HIGHEST
    h1 = jax.nn.sigmoid(jnp.dot(x, jnp.abs(params["pred_w1"]), precision=hp)
                        + params["pred_b1"])
    h2 = jax.nn.sigmoid(jnp.dot(h1, jnp.abs(params["pred_w2"]), precision=hp)
                        + params["pred_b2"])
    logit = jnp.sum(h2 * jnp.abs(params["pred_w3_row"]), axis=1) + params["pred_b3"][0, 0]
    return jax.nn.sigmoid(logit)


if __name__ == "__main__":
    knowledge_n, exer_n, student_n = 32, 20, 16

    key = jax.random.PRNGKey(0)
    k_param, k_kp1, k_kp2 = jax.random.split(key, 3)
    params = init_params(k_param, knowledge_n, exer_n, student_n)
    # Scale down the deeper all-positive layers so outputs are not saturated at
    # ~1.0 and the kernel-vs-reference comparison is actually discriminative.
    params["pred_w2"] = params["pred_w2"] * 0.1
    params["pred_w3_row"] = params["pred_w3_row"] * 0.05

    # bf16 MXU path => compare against f32 reference with a relaxed tolerance.
    RTOL = ATOL = 2e-2

    # --- small batch (single grid step, batch < tile) -----------------------
    B1 = 8
    stu_id1 = jnp.arange(B1, dtype=jnp.int32) % student_n
    exer1 = (jnp.arange(B1, dtype=jnp.int32) * 3) % exer_n
    kp1 = (jax.random.uniform(k_kp1, (B1, knowledge_n)) > 0.5).astype(jnp.float32)

    out1 = ncdnet_forward(params, stu_id1, exer1, kp1)
    jax.block_until_ready(out1)
    assert out1.shape == (B1,)
    np.testing.assert_allclose(
        np.asarray(out1), np.asarray(ncdnet_reference(params, stu_id1, exer1, kp1)),
        rtol=RTOL, atol=ATOL)

    # --- larger batch: multi-step grid with a partial edge block ------------
    B2 = 300
    stu_id2 = (jnp.arange(B2, dtype=jnp.int32) * 7) % student_n
    exer2 = (jnp.arange(B2, dtype=jnp.int32) * 5) % exer_n
    kp2 = (jax.random.uniform(k_kp2, (B2, knowledge_n)) > 0.5).astype(jnp.float32)
    ref2 = np.asarray(ncdnet_reference(params, stu_id2, exer2, kp2))

    out2 = ncdnet_forward(params, stu_id2, exer2, kp2, tb=128)   # 3 tiles, partial tail
    jax.block_until_ready(out2)
    assert out2.shape == (B2,)
    np.testing.assert_allclose(np.asarray(out2), ref2, rtol=RTOL, atol=ATOL)

    # --- same batch with the default (large) tile selection -----------------
    out3 = ncdnet_forward(params, stu_id2, exer2, kp2)
    jax.block_until_ready(out3)
    np.testing.assert_allclose(np.asarray(out3), ref2, rtol=RTOL, atol=ATOL)

    print("KERNEL_OK")
</pallas_src>

<mosaic_0001>
module attributes {stable_mosaic.version = 11 : i64} {
  func.func @_ncdnet_kernel(%arg0: i32, %arg1: memref<8x32xf32, #tpu.memory_space<vmem>>, %arg2: memref<8x32xf32, #tpu.memory_space<vmem>>, %arg3: memref<8x32xf32, #tpu.memory_space<vmem>>, %arg4: memref<8x1xf32, #tpu.memory_space<vmem>>, %arg5: memref<32x512xbf16, #tpu.memory_space<vmem>>, %arg6: memref<1x512xf32, #tpu.memory_space<vmem>>, %arg7: memref<512x256xbf16, #tpu.memory_space<vmem>>, %arg8: memref<1x256xf32, #tpu.memory_space<vmem>>, %arg9: memref<1x256xf32, #tpu.memory_space<vmem>>, %arg10: memref<1x1xf32, #tpu.memory_space<vmem>>, %arg11: memref<8x1xf32, #tpu.memory_space<vmem>>) attributes {dimension_semantics = [#tpu.dimension_semantics<parallel>], iteration_bounds = array<i64: 1>, scalar_prefetch = 0 : i64, scratch_operands = 0 : i64, tpu.core_type = #tpu.core_type<tc>, window_params = [{transform_indices = @transform_0, window_bounds = array<i64: 8, 32>}, {transform_indices = @transform_1, window_bounds = array<i64: 8, 32>}, {transform_indices = @transform_2, window_bounds = array<i64: 8, 32>}, {transform_indices = @transform_3, window_bounds = array<i64: 8, 1>}, {pipeline_mode = #tpu.pipeline_mode<synchronous>, transform_indices = @transform_4, window_bounds = array<i64: 32, 512>}, {pipeline_mode = #tpu.pipeline_mode<synchronous>, transform_indices = @transform_5, window_bounds = array<i64: 1, 512>}, {pipeline_mode = #tpu.pipeline_mode<synchronous>, transform_indices = @transform_6, window_bounds = array<i64: 512, 256>}, {pipeline_mode = #tpu.pipeline_mode<synchronous>, transform_indices = @transform_7, window_bounds = array<i64: 1, 256>}, {pipeline_mode = #tpu.pipeline_mode<synchronous>, transform_indices = @transform_8, window_bounds = array<i64: 1, 256>}, {pipeline_mode = #tpu.pipeline_mode<synchronous>, transform_indices = @transform_9, window_bounds = array<i64: 1, 1>}, {transform_indices = @transform_10, window_bounds = array<i64: 8, 1>}]} {
    %c0 = arith.constant 0 : index
    %c0_0 = arith.constant 0 : index
    %0 = vector.load %arg2[%c0, %c0_0] : memref<8x32xf32, #tpu.memory_space<vmem>>, vector<8x32xf32>
    %1 = arith.negf %0 : vector<8x32xf32>
    %2 = math.exp %1 : vector<8x32xf32>
    %cst = arith.constant 1.000000e+00 : f32
    %3 = vector.broadcast %cst : f32 to vector<8x32xf32>
    %4 = arith.addf %3, %2 : vector<8x32xf32>
    %5 = arith.divf %3, %4 : vector<8x32xf32>
    %c0_1 = arith.constant 0 : index
    %c0_2 = arith.constant 0 : index
    %6 = vector.load %arg3[%c0_1, %c0_2] : memref<8x32xf32, #tpu.memory_space<vmem>>, vector<8x32xf32>
    %7 = arith.negf %6 : vector<8x32xf32>
    %8 = math.exp %7 : vector<8x32xf32>
    %cst_3 = arith.constant 1.000000e+00 : f32
    %9 = vector.broadcast %cst_3 : f32 to vector<8x32xf32>
    %10 = arith.addf %9, %8 : vector<8x32xf32>
    %11 = arith.divf %9, %10 : vector<8x32xf32>
    %c0_4 = arith.constant 0 : index
    %c0_5 = arith.constant 0 : index
    %12 = vector.load %arg4[%c0_4, %c0_5] : memref<8x1xf32, #tpu.memory_space<vmem>>, vector<8x1xf32>
    %13 = arith.negf %12 : vector<8x1xf32>
    %14 = math.exp %13 : vector<8x1xf32>
    %cst_6 = arith.constant 1.000000e+00 : f32
    %15 = vector.broadcast %cst_6 : f32 to vector<8x1xf32>
    %16 = arith.addf %15, %14 : vector<8x1xf32>
    %17 = arith.divf %15, %16 : vector<8x1xf32>
    %c0_7 = arith.constant 0 : index
    %c0_8 = arith.constant 0 : index
    %18 = vector.load %arg1[%c0_7, %c0_8] : memref<8x32xf32, #tpu.memory_space<vmem>>, vector<8x32xf32>
    %19 = arith.subf %5, %11 : vector<8x32xf32>
    %20 = arith.mulf %18, %19 : vector<8x32xf32>
    %21 = vector.broadcast %17 : vector<8x1xf32> to vector<8x32xf32>
    %22 = arith.mulf %20, %21 : vector<8x32xf32>
    %23 = arith.truncf %22 : vector<8x32xf32> to vector<8x32xbf16>
    %c0_9 = arith.constant 0 : index
    %c0_10 = arith.constant 0 : index
    %24 = vector.load %arg5[%c0_9, %c0_10] : memref<32x512xbf16, #tpu.memory_space<vmem>>, vector<32x512xbf16>
    %cst_11 = arith.constant dense<0.000000e+00> : vector<8x512xf32>
    %25 = tpu.matmul %23, %24, %cst_11 {dimension_numbers = #tpu.dot_dimension_numbers<[1], [0], [0], [1], [0, 0, 1, 1], [], []>} : vector<8x32xbf16>, vector<32x512xbf16>, vector<8x512xf32> -> vector<8x512xf32>
    %c0_12 = arith.constant 0 : index
    %c0_13 = arith.constant 0 : index
    %26 = vector.load %arg6[%c0_12, %c0_13] : memref<1x512xf32, #tpu.memory_space<vmem>>, vector<1x512xf32>
    %27 = vector.broadcast %26 : vector<1x512xf32> to vector<8x512xf32>
    %28 = arith.addf %25, %27 : vector<8x512xf32>
    %cst_14 = arith.constant 5.000000e-01 : f32
    %29 = vector.broadcast %cst_14 : f32 to vector<8x512xf32>
    %30 = arith.mulf %29, %28 : vector<8x512xf32>
    %31 = math.tanh %30 : vector<8x512xf32>
    %cst_15 = arith.constant 5.000000e-01 : f32
    %32 = vector.broadcast %cst_15 : f32 to vector<8x512xf32>
    %33 = arith.mulf %32, %31 : vector<8x512xf32>
    %cst_16 = arith.constant 5.000000e-01 : f32
    %34 = vector.broadcast %cst_16 : f32 to vector<8x512xf32>
    %35 = arith.addf %33, %34 : vector<8x512xf32>
    %36 = arith.truncf %35 : vector<8x512xf32> to vector<8x512xbf16>
    %c0_17 = arith.constant 0 : index
    %c0_18 = arith.constant 0 : index
    %37 = vector.load %arg7[%c0_17, %c0_18] : memref<512x256xbf16, #tpu.memory_space<vmem>>, vector<512x256xbf16>
    %cst_19 = arith.constant dense<0.000000e+00> : vector<8x256xf32>
    %38 = tpu.matmul %36, %37, %cst_19 {dimension_numbers = #tpu.dot_dimension_numbers<[1], [0], [0], [1], [0, 0, 1, 1], [], []>} : vector<8x512xbf16>, vector<512x256xbf16>, vector<8x256xf32> -> vector<8x256xf32>
    %c0_20 = arith.constant 0 : index
    %c0_21 = arith.constant 0 : index
    %39 = vector.load %arg8[%c0_20, %c0_21] : memref<1x256xf32, #tpu.memory_space<vmem>>, vector<1x256xf32>
    %40 = vector.broadcast %39 : vector<1x256xf32> to vector<8x256xf32>
    %41 = arith.addf %38, %40 : vector<8x256xf32>
    %cst_22 = arith.constant 5.000000e-01 : f32
    %42 = vector.broadcast %cst_22 : f32 to vector<8x256xf32>
    %43 = arith.mulf %42, %41 : vector<8x256xf32>
    %44 = math.tanh %43 : vector<8x256xf32>
    %cst_23 = arith.constant 5.000000e-01 : f32
    %45 = vector.broadcast %cst_23 : f32 to vector<8x256xf32>
    %46 = arith.mulf %45, %44 : vector<8x256xf32>
    %cst_24 = arith.constant 5.000000e-01 : f32
    %47 = vector.broadcast %cst_24 : f32 to vector<8x256xf32>
    %48 = arith.addf %46, %47 : vector<8x256xf32>
    %c0_25 = arith.constant 0 : index
    %c0_26 = arith.constant 0 : index
    %49 = vector.load %arg9[%c0_25, %c0_26] : memref<1x256xf32, #tpu.memory_space<vmem>>, vector<1x256xf32>
    %50 = vector.broadcast %49 : vector<1x256xf32> to vector<8x256xf32>
    %51 = arith.mulf %48, %50 : vector<8x256xf32>
    %cst_27 = arith.constant dense<0.000000e+00> : vector<8xf32>
    %52 = vector.multi_reduction <add>, %51, %cst_27 [1] : vector<8x256xf32> to vector<8xf32>
    %53 = vector.shape_cast %52 : vector<8xf32> to vector<8x1xf32>
    %c0_28 = arith.constant 0 : index
    %c0_29 = arith.constant 0 : index
    %54 = vector.load %arg10[%c0_28, %c0_29] : memref<1x1xf32, #tpu.memory_space<vmem>>, vector<1x1xf32>
    %55 = vector.broadcast %54 : vector<1x1xf32> to vector<8x1xf32>
    %56 = arith.addf %53, %55 : vector<8x1xf32>
    %57 = arith.negf %56 : vector<8x1xf32>
    %58 = math.exp %57 : vector<8x1xf32>
    %cst_30 = arith.constant 1.000000e+00 : f32
    %59 = vector.broadcast %cst_30 : f32 to vector<8x1xf32>
    %60 = arith.addf %59, %58 : vector<8x1xf32>
    %61 = arith.divf %59, %60 : vector<8x1xf32>
    %c0_31 = arith.constant 0 : index
    %c0_32 = arith.constant 0 : index
    %62 = vector.load %arg11[%c0_31, %c0_32] : memref<8x1xf32, #tpu.memory_space<vmem>>, vector<8x1xf32>
    tpu.vector_store %arg11[%c0_31, %c0_32], %61 {strides = array<i32>} : memref<8x1xf32, #tpu.memory_space<vmem>>, vector<8x1xf32>,
    return
  }
  func.func @transform_0(%arg0: i32) -> (i32, i32) {
    %c0_i32 = arith.constant 0 : i32
    %c0_i32_0 = arith.constant 0 : i32
    return %arg0, %c0_i32 : i32, i32
  }
  func.func @transform_1(%arg0: i32) -> (i32, i32) {
    %c0_i32 = arith.constant 0 : i32
    %c0_i32_0 = arith.constant 0 : i32
    return %arg0, %c0_i32 : i32, i32
  }
  func.func @transform_2(%arg0: i32) -> (i32, i32) {
    %c0_i32 = arith.constant 0 : i32
    %c0_i32_0 = arith.constant 0 : i32
    return %arg0, %c0_i32 : i32, i32
  }
  func.func @transform_3(%arg0: i32) -> (i32, i32) {
    %c0_i32 = arith.constant 0 : i32
    %c0_i32_0 = arith.constant 0 : i32
    return %arg0, %c0_i32 : i32, i32
  }
  func.func @transform_4(%arg0: i32) -> (i32, i32) {
    %c0_i32 = arith.constant 0 : i32
    %c0_i32_0 = arith.constant 0 : i32
    %c0_i32_1 = arith.constant 0 : i32
    return %c0_i32, %c0_i32_0 : i32, i32
  }
  func.func @transform_5(%arg0: i32) -> (i32, i32) {
    %c0_i32 = arith.constant 0 : i32
    %c0_i32_0 = arith.constant 0 : i32
    %c0_i32_1 = arith.constant 0 : i32
    return %c0_i32, %c0_i32_0 : i32, i32
  }
  func.func @transform_6(%arg0: i32) -> (i32, i32) {
    %c0_i32 = arith.constant 0 : i32
    %c0_i32_0 = arith.constant 0 : i32
    %c0_i32_1 = arith.constant 0 : i32
    return %c0_i32, %c0_i32_0 : i32, i32
  }
  func.func @transform_7(%arg0: i32) -> (i32, i32) {
    %c0_i32 = arith.constant 0 : i32
    %c0_i32_0 = arith.constant 0 : i32
    %c0_i32_1 = arith.constant 0 : i32
    return %c0_i32, %c0_i32_0 : i32, i32
  }
  func.func @transform_8(%arg0: i32) -> (i32, i32) {
    %c0_i32 = arith.constant 0 : i32
    %c0_i32_0 = arith.constant 0 : i32
    %c0_i32_1 = arith.constant 0 : i32
    return %c0_i32, %c0_i32_0 : i32, i32
  }
  func.func @transform_9(%arg0: i32) -> (i32, i32) {
    %c0_i32 = arith.constant 0 : i32
    %c0_i32_0 = arith.constant 0 : i32
    %c0_i32_1 = arith.constant 0 : i32
    return %c0_i32, %c0_i32_0 : i32, i32
  }
  func.func @transform_10(%arg0: i32) -> (i32, i32) {
    %c0_i32 = arith.constant 0 : i32
    %c0_i32_0 = arith.constant 0 : i32
    return %arg0, %c0_i32 : i32, i32
  }
}

</mosaic_0001>

<llo_original>
// kernel: tpu_custom_call.1
$region0: #{tpu_custom_call.1}
  #allocation0 [shape = 'u32[]', space=smem, size = 0x4, offset = 0x4, fixed_abs, tag = 'smem constant byte address 0x4 - core index']
  #allocation1 [shape = 'u32[144,128]{1,0:T(1,128)}', space=vmem, size = 0x12000, scoped, tag = 'internal scratch']
  #allocation2 [shape = 'f32[1,1]{1,0:T(1,128)S(1)}', space=vmem, size = 0x200, scoped, tag = 'scoped memory for tpu_custom_call.1']
  %s0 = inlined_call_operand.vmem [shape: f32[8,32], index: 0, kind: input, shape index: {}]
  %s1 = inlined_call_operand.hbm [shape: f32[8,32], index: 1, kind: input, shape index: {}]
  %s2 = inlined_call_operand.hbm [shape: f32[8,32], index: 2, kind: input, shape index: {}]
  %s3 = inlined_call_operand.vmem [shape: f32[8,1], index: 3, kind: input, shape index: {}]
  %s4 = inlined_call_operand.hbm [shape: bf16[32,512], index: 4, kind: input, shape index: {}]
  %s5 = inlined_call_operand.vmem [shape: f32[1,512], index: 5, kind: input, shape index: {}]
  %s6 = inlined_call_operand.hbm [shape: bf16[512,256], index: 6, kind: input, shape index: {}]
  %s7 = inlined_call_operand.vmem [shape: f32[1,256], index: 7, kind: input, shape index: {}]
  %s8 = inlined_call_operand.vmem [shape: f32[1,256], index: 8, kind: input, shape index: {}]
  %s9 = inlined_call_operand.<no memory space> [shape: f32[1,1], index: 9, kind: input, shape index: {}]
  %s10 = inlined_call_operand.vmem [shape: f32[8,1], index: 10, kind: output, shape index: {}]
  %s11 = sld [smem:[#allocation0]]
  $region66: #{tpu_custom_call.1} parent=0
    _
  %s13 = ssub.s32 1, %s11
  %s14 = scalar_select 0, %s13, %s11
  %v15 = vstv %s9
  %16 = vst [vmem:[#allocation2] sm:$0x1] %v15
  $region1: #{tpu_custom_call.1} parent=0
    #allocation3 [shape = 'u8[4096]{0}', space=vmem, size = 0x1000, scoped, tag = 'input window, operand 1, single buffered']
    #allocation4 [shape = 's32[1]{0}', space=sflag, size = 0x4, scoped, tag = 'scoped memory for tpu_custom_call.1']
    #allocation5 [shape = 'u8[4096]{0}', space=vmem, size = 0x1000, scoped, tag = 'input window, operand 2, single buffered']
    #allocation6 [shape = 's32[1]{0}', space=sflag, size = 0x4, scoped, tag = 'scoped memory for tpu_custom_call.1']
    #allocation7 [shape = 'u8[32768]{0}', space=vmem, size = 0x8000, scoped, tag = 'input window, operand 4, single buffered']
    #allocation8 [shape = 'u8[262144]{0}', space=vmem, size = 0x40000, scoped, tag = 'input window, operand 6, single buffered']
    #allocation9 [shape = 's32[1]{0}', space=sflag, size = 0x4, scoped, tag = 'scoped memory for tpu_custom_call.1']
    %17 = vsyncpa [#allocation4], 0
    %18 = vsyncpa [#allocation6], 0
    %19 = vsyncpa [#allocation9], 0
    // Predicated region
    $region2: #{tpu_custom_call.1} parent=1 // pred_check
      _
    $region3: #{tpu_custom_call.1} parent=1 // pred_check_branch
      %21 = sbr.rel (0) target = $region5
    $region4: #{tpu_custom_call.1} parent=1 // pred_region
      _
    $region5: #{tpu_custom_call.1} parent=1 // pred_fallthru
      _
    // Predicated region
    $region6: #{tpu_custom_call.1} parent=1 // pred_check
      _
    $region7: #{tpu_custom_call.1} parent=1 // pred_check_branch
      %23 = sbr.rel (0) target = $region9
    $region8: #{tpu_custom_call.1} parent=1 // pred_region
      %s25 = ssub.s32 128, 128
      %26 = vsyncadd [#allocation4], %s25
      %s28 = sshll.u32 [#allocation3], 4
      %s29 = int_to_ptr.vmem [resolvable:$true] %s28
      %31 = dma.hbm_to_vmem [thread:$0]  %s1, 128, %s29, [#allocation4]
    $region9: #{tpu_custom_call.1} parent=1 // pred_fallthru
      _
    // Predicated region
    $region10: #{tpu_custom_call.1} parent=1 // pred_check
      _
    $region11: #{tpu_custom_call.1} parent=1 // pred_check_branch
      %33 = sbr.rel (0) target = $region13
    $region12: #{tpu_custom_call.1} parent=1 // pred_region
      %s35 = ssub.s32 128, 128
      %36 = vsyncadd [#allocation6], %s35
      %s38 = sshll.u32 [#allocation5], 4
      %s39 = int_to_ptr.vmem [resolvable:$true] %s38
      %41 = dma.hbm_to_vmem [thread:$0]  %s2, 128, %s39, [#allocation6]
    $region13: #{tpu_custom_call.1} parent=1 // pred_fallthru
      _
    // Predicated region
    $region14: #{tpu_custom_call.1} parent=1 // pred_check
      _
    $region15: #{tpu_custom_call.1} parent=1 // pred_check_branch
      %43 = sbr.rel (0) target = $region17
    $region16: #{tpu_custom_call.1} parent=1 // pred_region
      _
    $region17: #{tpu_custom_call.1} parent=1 // pred_fallthru
      _
    // Predicated region
    $region18: #{tpu_custom_call.1} parent=1 // pred_check
      _
    $region19: #{tpu_custom_call.1} parent=1 // pred_check_branch
      %45 = sbr.rel (0) target = $region21
    $region20: #{tpu_custom_call.1} parent=1 // pred_region
      %s47 = ssub.s32 1024, 1024
      %48 = vsyncadd [#allocation6], %s47
      %s49 = sshll.u32 [#allocation7], 4
      %s50 = int_to_ptr.vmem [resolvable:$true] %s49
      %55 = dma.hbm_to_vmem [thread:$0]  %s4, 1024, %s50, [#allocation6], 256, 256, 16
    $region21: #{tpu_custom_call.1} parent=1 // pred_fallthru
      _
    // Predicated region
    $region22: #{tpu_custom_call.1} parent=1 // pred_check
      _
    $region23: #{tpu_custom_call.1} parent=1 // pred_check_branch
      %57 = sbr.rel (0) target = $region25
    $region24: #{tpu_custom_call.1} parent=1 // pred_region
      _
    $region25: #{tpu_custom_call.1} parent=1 // pred_fallthru
      _
    // Predicated region
    $region26: #{tpu_custom_call.1} parent=1 // pred_check
      _
    $region27: #{tpu_custom_call.1} parent=1 // pred_check_branch
      %59 = sbr.rel (0) target = $region29
    $region28: #{tpu_custom_call.1} parent=1 // pred_region
      %s61 = ssub.s32 8192, 8192
      %62 = vsyncadd [#allocation9], %s61
      %s63 = sshll.u32 [#allocation8], 4
      %s64 = int_to_ptr.vmem [resolvable:$true] %s63
      %69 = dma.hbm_to_vmem [thread:$0]  %s6, 8192, %s64, [#allocation9], 128, 128, 8
    $region29: #{tpu_custom_call.1} parent=1 // pred_fallthru
      _
    // Predicated region
    $region30: #{tpu_custom_call.1} parent=1 // pred_check
      _
    $region31: #{tpu_custom_call.1} parent=1 // pred_check_branch
      %71 = sbr.rel (0) target = $region33
    $region32: #{tpu_custom_call.1} parent=1 // pred_region
      _
    $region33: #{tpu_custom_call.1} parent=1 // pred_fallthru
      _
    // Predicated region
    $region34: #{tpu_custom_call.1} parent=1 // pred_check
      _
    $region35: #{tpu_custom_call.1} parent=1 // pred_check_branch
      %73 = sbr.rel (0) target = $region37
    $region36: #{tpu_custom_call.1} parent=1 // pred_region
      _
    $region37: #{tpu_custom_call.1} parent=1 // pred_fallthru
      _
    // Predicated region
    $region38: #{tpu_custom_call.1} parent=1 // pred_check
      _
    $region39: #{tpu_custom_call.1} parent=1 // pred_check_branch
      %75 = sbr.rel (0) target = $region41
    $region40: #{tpu_custom_call.1} parent=1 // pred_region
      _
    $region41: #{tpu_custom_call.1} parent=1 // pred_fallthru
      _
    // Predicated region
    $region42: #{tpu_custom_call.1} parent=1 // pred_check
      _
    $region43: #{tpu_custom_call.1} parent=1 // pred_check_branch
      %77 = sbr.rel (0) target = $region45
    $region44: #{tpu_custom_call.1} parent=1 // pred_region
      %78 = dma.done [#allocation4], 128
    $region45: #{tpu_custom_call.1} parent=1 // pred_fallthru
      _
    // Predicated region
    $region46: #{tpu_custom_call.1} parent=1 // pred_check
      _
    $region47: #{tpu_custom_call.1} parent=1 // pred_check_branch
      %80 = sbr.rel (0) target = $region49
    $region48: #{tpu_custom_call.1} parent=1 // pred_region
      %81 = dma.done [#allocation6], 128
    $region49: #{tpu_custom_call.1} parent=1 // pred_fallthru
      _
    // Predicated region
    $region50: #{tpu_custom_call.1} parent=1 // pred_check
      _
    $region51: #{tpu_custom_call.1} parent=1 // pred_check_branch
      %83 = sbr.rel (0) target = $region53
    $region52: #{tpu_custom_call.1} parent=1 // pred_region
      %84 = dma.done [#allocation6], 1024
    $region53: #{tpu_custom_call.1} parent=1 // pred_fallthru
      _
    // Predicated region
    $region54: #{tpu_custom_call.1} parent=1 // pred_check
      _
    $region55: #{tpu_custom_call.1} parent=1 // pred_check_branch
      %86 = sbr.rel (0) target = $region57
    $region56: #{tpu_custom_call.1} parent=1 // pred_region
      %87 = dma.done [#allocation9], 8192
    $region57: #{tpu_custom_call.1} parent=1 // pred_fallthru
      _
    %v89 = vld [vmem:[#allocation3] sm:$0xff]
    %v90 = vxor.u32 %v89, 2147483648
    %v91 = vmul.f32 %v90, 1.442695
    %v92 = vpow.pop %v91
    %v93 = vadd.f32 %v92, 1.0
    %v94 = vrcp.pop %v93
    %v95 = vmul.f32 1.0, %v94
    %v96 = vld [vmem:[#allocation5] sm:$0xff]
    %v97 = vxor.u32 %v96, 2147483648
    %v98 = vmul.f32 %v97, 1.442695
    %v99 = vpow.pop %v98
    %v100 = vadd.f32 %v99, 1.0
    %v101 = vrcp.pop %v100
    %v102 = vmul.f32 1.0, %v101
    %v103 = vld [vmem:[%s3] sm:$0xff]
    %v104 = vxor.u32 %v103, 2147483648
    %v105 = vmul.f32 %v104, 1.442695
    %v106 = vpow.pop %v105
    %v107 = vadd.f32 %v106, 1.0
    %v108 = vrcp.pop %v107
    %v109 = vmul.f32 1.0, %v108
    %v110 = vld [vmem:[%s0] sm:$0xff]
    %v111 = vsub.f32 %v95, %v102
    %v112 = vmul.f32 %v110, %v111
    %114 = vset.pattern.permute.xlu0 0
    %115 = vperm.xlu0 %114, %v109
    %v116 = vpop.permute.xlu0 %115
    %v118 = vmul.f32 %v112, %v116
    %v119 = vpack.c.bf16 %v118, %v118
    %v120 = vld [vmem:[#allocation7] sm:$0xff]
    %v121 = vld [vmem:[#allocation7 + $0x8] sm:$0xff]
    %v122 = vld [vmem:[#allocation7 + $0x10] sm:$0xff]
    %v123 = vld [vmem:[#allocation7 + $0x18] sm:$0xff]
    %v124 = vld [vmem:[#allocation7 + $0x20] sm:$0xff]
    %v125 = vld [vmem:[#allocation7 + $0x28] sm:$0xff]
    %v126 = vld [vmem:[#allocation7 + $0x30] sm:$0xff]
    %v127 = vld [vmem:[#allocation7 + $0x38] sm:$0xff]
    %v128 = vld [vmem:[%s5] sm:$0xf]
    %v130 = vlaneseq
    %v131 = vshrl.u32 %v130, 7
    %v132 = vsub.s32 0, %v131
    %v133 = vrot.slane %v128, %v132
    %v134 = vlaneseq
    %v135 = vshrl.u32 %v134, 7
    %v136 = vsub.s32 1, %v135
    %v137 = vrot.slane %v128, %v136
    %v138 = vlaneseq
    %v139 = vshrl.u32 %v138, 7
    %v140 = vsub.s32 2, %v139
    %v141 = vrot.slane %v128, %v140
    %v142 = vlaneseq
    %v143 = vshrl.u32 %v142, 7
    %v144 = vsub.s32 3, %v143
    %v145 = vrot.slane %v128, %v144
    %v158 = vunpack.c.l.b16 %v120
    %v159 = vunpack.c.h.b16 %v120
    %v160 = vunpack.c.l.b16 %v121
    %v161 = vunpack.c.h.b16 %v121
    %v162 = vunpack.c.l.b16 %v122
    %v163 = vunpack.c.h.b16 %v122
    %v164 = vunpack.c.l.b16 %v123
    %v165 = vunpack.c.h.b16 %v123
    %v166 = vunpack.c.l.b16 %v124
    %v167 = vunpack.c.h.b16 %v124
    %v168 = vunpack.c.l.b16 %v125
    %v169 = vunpack.c.h.b16 %v125
    %v170 = vunpack.c.l.b16 %v126
    %v171 = vunpack.c.h.b16 %v126
    %v172 = vunpack.c.l.b16 %v127
    %v173 = vunpack.c.h.b16 %v127
    %v174 = vpack.c.b16 %v162, %v158
    %v175 = vpack.c.b16 %v163, %v159
    %v176 = vpack.c.b16 %v164, %v160
    %v177 = vpack.c.b16 %v165, %v161
    %v178 = vpack.c.b16 %v170, %v166
    %v179 = vpack.c.b16 %v171, %v167
    %v180 = vpack.c.b16 %v172, %v168
    %v181 = vpack.c.b16 %v173, %v169
    %vm190 = vcmask 261120
    %v192 = vsel %vm190, %v119, 0
    %194 = vmatprep.subr.bf16.mxu0 0
    %195 = vmatpush1.bf16.msra.mxu0 0
    %196 = vmatprep.subr.bf16.mxu0 0
    %197 = vmatpush1.bf16.msra.mxu0 0
    %198 = vmatprep.subr.bf16.mxu0 0
    %199 = vmatpush1.bf16.msra.mxu0 0
    %200 = vmatprep.subr.bf16.mxu0 0
    %201 = vmatpush1.bf16.msra.mxu0 0
    %202 = vmatprep.subr.bf16.mxu0 0
    %203 = vmatpush1.bf16.msra.mxu0 0
    %204 = vmatprep.subr.bf16.mxu0 0
    %205 = vmatpush1.bf16.msra.mxu0 0
    %206 = vmatprep.subr.bf16.mxu0 %v179
    %207 = vmatpush1.bf16.msra.mxu0 %v178
    %208 = vmatprep.subr.bf16.mxu0 %v175
    %209 = vmatpush1.bf16.msra.mxu0 %v174
    %210 = vmatprep.subr.bf16.mxu0 0
    %211 = vmatpush2.bf16.msra.mxu0 0
    %212 = vmatprep.subr.bf16.mxu0 0
    %213 = vmatpush2.bf16.msra.mxu0 0
    %214 = vmatprep.subr.bf16.mxu0 0
    %215 = vmatpush2.bf16.msra.mxu0 0
    %216 = vmatprep.subr.bf16.mxu0 0
    %217 = vmatpush2.bf16.msra.mxu0 0
    %218 = vmatprep.subr.bf16.mxu0 0
    %219 = vmatpush2.bf16.msra.mxu0 0
    %220 = vmatprep.subr.bf16.mxu0 0
    %221 = vmatpush2.bf16.msra.mxu0 0
    %222 = vmatprep.subr.bf16.mxu0 0
    %223 = vmatpush2.bf16.msra.mxu0 0
    %224 = vmatprep.subr.bf16.mxu0 0
    %225 = vmatpush2.bf16.msra.mxu0 0
    %226 = vmatprep.mubr.bf16.mxu0 0
    %227 = vmatmul.mubr.bf16.gmra.mxu0 %v192
    %v228 = vpop.f32.mrf.mxu0
    %v229 = vadd.f32 %v133, %v228
    %v230 = vpop.f32.mrf.mxu0
    %v231 = vadd.f32 %v137, %v230
    %v232 = vpop.f32.mrf.mxu0
    %v233 = vpop.f32.mrf.mxu0
    %234 = vdwg.mxu0
    %235 = vmatprep.subr.bf16.mxu0 0
    %236 = vmatpush1.bf16.msra.mxu0 0
    %237 = vmatprep.subr.bf16.mxu0 0
    %238 = vmatpush1.bf16.msra.mxu0 0
    %239 = vmatprep.subr.bf16.mxu0 0
    %240 = vmatpush1.bf16.msra.mxu0 0
    %241 = vmatprep.subr.bf16.mxu0 0
    %242 = vmatpush1.bf16.msra.mxu0 0
    %243 = vmatprep.subr.bf16.mxu0 0
    %244 = vmatpush1.bf16.msra.mxu0 0
    %245 = vmatprep.subr.bf16.mxu0 0
    %246 = vmatpush1.bf16.msra.mxu0 0
    %247 = vmatprep.subr.bf16.mxu0 %v181
    %248 = vmatpush1.bf16.msra.mxu0 %v180
    %249 = vmatprep.subr.bf16.mxu0 %v177
    %250 = vmatpush1.bf16.msra.mxu0 %v176
    %251 = vmatprep.subr.bf16.mxu0 0
    %252 = vmatpush2.bf16.msra.mxu0 0
    %253 = vmatprep.subr.bf16.mxu0 0
    %254 = vmatpush2.bf16.msra.mxu0 0
    %255 = vmatprep.subr.bf16.mxu0 0
    %256 = vmatpush2.bf16.msra.mxu0 0
    %257 = vmatprep.subr.bf16.mxu0 0
    %258 = vmatpush2.bf16.msra.mxu0 0
    %259 = vmatprep.subr.bf16.mxu0 0
    %260 = vmatpush2.bf16.msra.mxu0 0
    %261 = vmatprep.subr.bf16.mxu0 0
    %262 = vmatpush2.bf16.msra.mxu0 0
    %263 = vmatprep.subr.bf16.mxu0 0
    %264 = vmatpush2.bf16.msra.mxu0 0
    %265 = vmatprep.subr.bf16.mxu0 0
    %266 = vmatpush2.bf16.msra.mxu0 0
    %267 = vmatprep.mubr.bf16.mxu0 0
    %268 = vmatmul.mubr.bf16.gmra.mxu0 %v192
    %v269 = vpop.f32.mrf.mxu0
    %v270 = vadd.f32 %v141, %v269
    %v271 = vpop.f32.mrf.mxu0
    %v272 = vadd.f32 %v145, %v271
    %v273 = vpop.f32.mrf.mxu0
    %v274 = vpop.f32.mrf.mxu0
    %275 = vdwg.mxu0
    %v276 = vmul.f32 %v229, 0.5
    %v277 = vmul.f32 %v231, 0.5
    %v278 = vmul.f32 %v270, 0.5
    %v279 = vmul.f32 %v272, 0.5
    %v280 = vtanh.pop %v276
    %v281 = vtanh.pop %v277
    %v282 = vtanh.pop %v278
    %v283 = vtanh.pop %v279
    %v284 = vmul.f32 %v280, 0.5
    %v285 = vmul.f32 %v281, 0.5
    %v286 = vmul.f32 %v282, 0.5
    %v287 = vmul.f32 %v283, 0.5
    %v288 = vadd.f32 %v284, 0.5
    %v289 = vadd.f32 %v285, 0.5
    %v290 = vadd.f32 %v286, 0.5
    %v291 = vadd.f32 %v287, 0.5
    %v292 = vpack.c.bf16 %v288, %v288
    %v293 = vpack.c.bf16 %v289, %v289
    %v294 = vpack.c.bf16 %v290, %v290
    %v295 = vpack.c.bf16 %v291, %v291
    %v296 = vld [vmem:[#allocation8] sm:$0xff]
    %v297 = vld [vmem:[#allocation8 + $0x8] sm:$0xff]
    %v298 = vld [vmem:[#allocation8 + $0x10] sm:$0xff]
    %v299 = vld [vmem:[#allocation8 + $0x18] sm:$0xff]
    %v300 = vld [vmem:[#allocation8 + $0x20] sm:$0xff]
    %v301 = vld [vmem:[#allocation8 + $0x28] sm:$0xff]
    %v302 = vld [vmem:[#allocation8 + $0x30] sm:$0xff]
    %v303 = vld [vmem:[#allocation8 + $0x38] sm:$0xff]
    %v304 = vld [vmem:[#allocation8 + $0x40] sm:$0xff]
    %v305 = vld [vmem:[#allocation8 + $0x48] sm:$0xff]
    %v306 = vld [vmem:[#allocation8 + $0x50] sm:$0xff]
    %v307 = vld [vmem:[#allocation8 + $0x58] sm:$0xff]
    %v308 = vld [vmem:[#allocation8 + $0x60] sm:$0xff]
    %v309 = vld [vmem:[#allocation8 + $0x68] sm:$0xff]
    %v310 = vld [vmem:[#allocation8 + $0x70] sm:$0xff]
    %v311 = vld [vmem:[#allocation8 + $0x78] sm:$0xff]
    %v312 = vld [vmem:[#allocation8 + $0x80] sm:$0xff]
    %v313 = vld [vmem:[#allocation8 + $0x88] sm:$0xff]
    %v314 = vld [vmem:[#allocation8 + $0x90] sm:$0xff]
    %v315 = vld [vmem:[#allocation8 + $0x98] sm:$0xff]
    %v316 = vld [vmem:[#allocation8 + $0xa0] sm:$0xff]
    %v317 = vld [vmem:[#allocation8 + $0xa8] sm:$0xff]
    %v318 = vld [vmem:[#allocation8 + $0xb0] sm:$0xff]
    %v319 = vld [vmem:[#allocation8 + $0xb8] sm:$0xff]
    %v320 = vld [vmem:[#allocation8 + $0xc0] sm:$0xff]
    %v321 = vld [vmem:[#allocation8 + $0xc8] sm:$0xff]
    %v322 = vld [vmem:[#allocation8 + $0xd0] sm:$0xff]
    %v323 = vld [vmem:[#allocation8 + $0xd8] sm:$0xff]
    %v324 = vld [vmem:[#allocation8 + $0xe0] sm:$0xff]
    %v325 = vld [vmem:[#allocation8 + $0xe8] sm:$0xff]
    %v326 = vld [vmem:[#allocation8 + $0xf0] sm:$0xff]
    %v327 = vld [vmem:[#allocation8 + $0xf8] sm:$0xff]
    %v328 = vld [vmem:[#allocation8 + $0x100] sm:$0xff]
    %v329 = vld [vmem:[#allocation8 + $0x108] sm:$0xff]
    %v330 = vld [vmem:[#allocation8 + $0x110] sm:$0xff]
    %v331 = vld [vmem:[#allocation8 + $0x118] sm:$0xff]
    %v332 = vld [vmem:[#allocation8 + $0x120] sm:$0xff]
    %v333 = vld [vmem:[#allocation8 + $0x128] sm:$0xff]
    %v334 = vld [vmem:[#allocation8 + $0x130] sm:$0xff]
    %v335 = vld [vmem:[#allocation8 + $0x138] sm:$0xff]
    %v336 = vld [vmem:[#allocation8 + $0x140] sm:$0xff]
    %v337 = vld [vmem:[#allocation8 + $0x148] sm:$0xff]
    %v338 = vld [vmem:[#allocation8 + $0x150] sm:$0xff]
    %v339 = vld [vmem:[#allocation8 + $0x158] sm:$0xff]
    %v340 = vld [vmem:[#allocation8 + $0x160] sm:$0xff]
    %v341 = vld [vmem:[#allocation8 + $0x168] sm:$0xff]
    %v342 = vld [vmem:[#allocation8 + $0x170] sm:$0xff]
    %v343 = vld [vmem:[#allocation8 + $0x178] sm:$0xff]
    %v344 = vld [vmem:[#allocation8 + $0x180] sm:$0xff]
    %v345 = vld [vmem:[#allocation8 + $0x188] sm:$0xff]
    %v346 = vld [vmem:[#allocation8 + $0x190] sm:$0xff]
    %v347 = vld [vmem:[#allocation8 + $0x198] sm:$0xff]
    %v348 = vld [vmem:[#allocation8 + $0x1a0] sm:$0xff]
    %v349 = vld [vmem:[#allocation8 + $0x1a8] sm:$0xff]
    %v350 = vld [vmem:[#allocation8 + $0x1b0] sm:$0xff]
    %v351 = vld [vmem:[#allocation8 + $0x1b8] sm:$0xff]
    %v352 = vld [vmem:[#allocation8 + $0x1c0] sm:$0xff]
    %v353 = vld [vmem:[#allocation8 + $0x1c8] sm:$0xff]
    %v354 = vld [vmem:[#allocation8 + $0x1d0] sm:$0xff]
    %v355 = vld [vmem:[#allocation8 + $0x1d8] sm:$0xff]
    %v356 = vld [vmem:[#allocation8 + $0x1e0] sm:$0xff]
    %v357 = vld [vmem:[#allocation8 + $0x1e8] sm:$0xff]
    %v358 = vld [vmem:[#allocation8 + $0x1f0] sm:$0xff]
    %v359 = vld [vmem:[#allocation8 + $0x1f8] sm:$0xff]
    %v360 = vld [vmem:[%s7] sm:$0x3]
    %v362 = vlaneseq
    %v363 = vshrl.u32 %v362, 7
    %v364 = vsub.s32 0, %v363
    %v365 = vrot.slane %v360, %v364
    %v366 = vlaneseq
    %v367 = vshrl.u32 %v366, 7
    %v368 = vsub.s32 1, %v367
    %v369 = vrot.slane %v360, %v368
    %v436 = vunpack.c.l.b16 %v296
    %v437 = vunpack.c.h.b16 %v296
    %v438 = vunpack.c.l.b16 %v297
    %v439 = vunpack.c.h.b16 %v297
    %v440 = vunpack.c.l.b16 %v298
    %v441 = vunpack.c.h.b16 %v298
    %v442 = vunpack.c.l.b16 %v299
    %v443 = vunpack.c.h.b16 %v299
    %v444 = vunpack.c.l.b16 %v300
    %v445 = vunpack.c.h.b16 %v300
    %v446 = vunpack.c.l.b16 %v301
    %v447 = vunpack.c.h.b16 %v301
    %v448 = vunpack.c.l.b16 %v302
    %v449 = vunpack.c.h.b16 %v302
    %v450 = vunpack.c.l.b16 %v303
    %v451 = vunpack.c.h.b16 %v303
    %v452 = vunpack.c.l.b16 %v304
    %v453 = vunpack.c.h.b16 %v304
    %v454 = vunpack.c.l.b16 %v305
    %v455 = vunpack.c.h.b16 %v305
    %v456 = vunpack.c.l.b16 %v306
    %v457 = vunpack.c.h.b16 %v306
    %v458 = vunpack.c.l.b16 %v307
    %v459 = vunpack.c.h.b16 %v307
    %v460 = vunpack.c.l.b16 %v308
    %v461 = vunpack.c.h.b16 %v308
    %v462 = vunpack.c.l.b16 %v309
    %v463 = vunpack.c.h.b16 %v309
    %v464 = vunpack.c.l.b16 %v310
    %v465 = vunpack.c.h.b16 %v310
    %v466 = vunpack.c.l.b16 %v311
    %v467 = vunpack.c.h.b16 %v311
    %v468 = vunpack.c.l.b16 %v312
    %v469 = vunpack.c.h.b16 %v312
    %v470 = vunpack.c.l.b16 %v313
    %v471 = vunpack.c.h.b16 %v313
    %v472 = vunpack.c.l.b16 %v314
    %v473 = vunpack.c.h.b16 %v314
    %v474 = vunpack.c.l.b16 %v315
    %v475 = vunpack.c.h.b16 %v315
    %v476 = vunpack.c.l.b16 %v316
    %v477 = vunpack.c.h.b16 %v316
    %v478 = vunpack.c.l.b16 %v317
    %v479 = vunpack.c.h.b16 %v317
    %v480 = vunpack.c.l.b16 %v318
    %v481 = vunpack.c.h.b16 %v318
    %v482 = vunpack.c.l.b16 %v319
    %v483 = vunpack.c.h.b16 %v319
    %v484 = vunpack.c.l.b16 %v320
    %v485 = vunpack.c.h.b16 %v320
    %v486 = vunpack.c.l.b16 %v321
    %v487 = vunpack.c.h.b16 %v321
    %v488 = vunpack.c.l.b16 %v322
    %v489 = vunpack.c.h.b16 %v322
    %v490 = vunpack.c.l.b16 %v323
    %v491 = vunpack.c.h.b16 %v323
    %v492 = vunpack.c.l.b16 %v324
    %v493 = vunpack.c.h.b16 %v324
    %v494 = vunpack.c.l.b16 %v325
    %v495 = vunpack.c.h.b16 %v325
    %v496 = vunpack.c.l.b16 %v326
    %v497 = vunpack.c.h.b16 %v326
    %v498 = vunpack.c.l.b16 %v327
    %v499 = vunpack.c.h.b16 %v327
    %v500 = vunpack.c.l.b16 %v328
    %v501 = vunpack.c.h.b16 %v328
    %v502 = vunpack.c.l.b16 %v329
    %v503 = vunpack.c.h.b16 %v329
    %v504 = vunpack.c.l.b16 %v330
    %v505 = vunpack.c.h.b16 %v330
    %v506 = vunpack.c.l.b16 %v331
    %v507 = vunpack.c.h.b16 %v331
    %v508 = vunpack.c.l.b16 %v332
    %v509 = vunpack.c.h.b16 %v332
    %v510 = vunpack.c.l.b16 %v333
    %v511 = vunpack.c.h.b16 %v333
    %v512 = vunpack.c.l.b16 %v334
    %v513 = vunpack.c.h.b16 %v334
    %v514 = vunpack.c.l.b16 %v335
    %v515 = vunpack.c.h.b16 %v335
    %v516 = vunpack.c.l.b16 %v336
    %v517 = vunpack.c.h.b16 %v336
    %v518 = vunpack.c.l.b16 %v337
    %v519 = vunpack.c.h.b16 %v337
    %v520 = vunpack.c.l.b16 %v338
    %v521 = vunpack.c.h.b16 %v338
    %v522 = vunpack.c.l.b16 %v339
    %v523 = vunpack.c.h.b16 %v339
    %v524 = vunpack.c.l.b16 %v340
    %v525 = vunpack.c.h.b16 %v340
    %v526 = vunpack.c.l.b16 %v341
    %v527 = vunpack.c.h.b16 %v341
    %v528 = vunpack.c.l.b16 %v342
    %v529 = vunpack.c.h.b16 %v342
    %v530 = vunpack.c.l.b16 %v343
    %v531 = vunpack.c.h.b16 %v343
    %v532 = vunpack.c.l.b16 %v344
    %v533 = vunpack.c.h.b16 %v344
    %v534 = vunpack.c.l.b16 %v345
    %v535 = vunpack.c.h.b16 %v345
    %v536 = vunpack.c.l.b16 %v346
    %v537 = vunpack.c.h.b16 %v346
    %v538 = vunpack.c.l.b16 %v347
    %v539 = vunpack.c.h.b16 %v347
    %v540 = vunpack.c.l.b16 %v348
    %v541 = vunpack.c.h.b16 %v348
    %v542 = vunpack.c.l.b16 %v349
    %v543 = vunpack.c.h.b16 %v349
    %v544 = vunpack.c.l.b16 %v350
    %v545 = vunpack.c.h.b16 %v350
    %v546 = vunpack.c.l.b16 %v351
    %v547 = vunpack.c.h.b16 %v351
    %v548 = vunpack.c.l.b16 %v352
    %v549 = vunpack.c.h.b16 %v352
    %v550 = vunpack.c.l.b16 %v353
    %v551 = vunpack.c.h.b16 %v353
    %v552 = vunpack.c.l.b16 %v354
    %v553 = vunpack.c.h.b16 %v354
    %v554 = vunpack.c.l.b16 %v355
    %v555 = vunpack.c.h.b16 %v355
    %v556 = vunpack.c.l.b16 %v356
    %v557 = vunpack.c.h.b16 %v356
    %v558 = vunpack.c.l.b16 %v357
    %v559 = vunpack.c.h.b16 %v357
    %v560 = vunpack.c.l.b16 %v358
    %v561 = vunpack.c.h.b16 %v358
    %v562 = vunpack.c.l.b16 %v359
    %v563 = vunpack.c.h.b16 %v359
    %v564 = vpack.c.b16 %v438, %v436
    %v565 = vpack.c.b16 %v439, %v437
    %v566 = vpack.c.b16 %v442, %v440
    %v567 = vpack.c.b16 %v443, %v441
    %v568 = vpack.c.b16 %v446, %v444
    %v569 = vpack.c.b16 %v447, %v445
    %v570 = vpack.c.b16 %v450, %v448
    %v571 = vpack.c.b16 %v451, %v449
    %v572 = vpack.c.b16 %v454, %v452
    %v573 = vpack.c.b16 %v455, %v453
    %v574 = vpack.c.b16 %v458, %v456
    %v575 = vpack.c.b16 %v459, %v457
    %v576 = vpack.c.b16 %v462, %v460
    %v577 = vpack.c.b16 %v463, %v461
    %v578 = vpack.c.b16 %v466, %v464
    %v579 = vpack.c.b16 %v467, %v465
    %v580 = vpack.c.b16 %v470, %v468
    %v581 = vpack.c.b16 %v471, %v469
    %v582 = vpack.c.b16 %v474, %v472
    %v583 = vpack.c.b16 %v475, %v473
    %v584 = vpack.c.b16 %v478, %v476
    %v585 = vpack.c.b16 %v479, %v477
    %v586 = vpack.c.b16 %v482, %v480
    %v587 = vpack.c.b16 %v483, %v481
    %v588 = vpack.c.b16 %v486, %v484
    %v589 = vpack.c.b16 %v487, %v485
    %v590 = vpack.c.b16 %v490, %v488
    %v591 = vpack.c.b16 %v491, %v489
    %v592 = vpack.c.b16 %v494, %v492
    %v593 = vpack.c.b16 %v495, %v493
    %v594 = vpack.c.b16 %v498, %v496
    %v595 = vpack.c.b16 %v499, %v497
    %v596 = vpack.c.b16 %v502, %v500
    %v597 = vpack.c.b16 %v503, %v501
    %v598 = vpack.c.b16 %v506, %v504
    %v599 = vpack.c.b16 %v507, %v505
    %v600 = vpack.c.b16 %v510, %v508
    %v601 = vpack.c.b16 %v511, %v509
    %v602 = vpack.c.b16 %v514, %v512
    %v603 = vpack.c.b16 %v515, %v513
    %v604 = vpack.c.b16 %v518, %v516
    %v605 = vpack.c.b16 %v519, %v517
    %v606 = vpack.c.b16 %v522, %v520
    %v607 = vpack.c.b16 %v523, %v521
    %v608 = vpack.c.b16 %v526, %v524
    %v609 = vpack.c.b16 %v527, %v525
    %v610 = vpack.c.b16 %v530, %v528
    %v611 = vpack.c.b16 %v531, %v529
    %v612 = vpack.c.b16 %v534, %v532
    %v613 = vpack.c.b16 %v535, %v533
    %v614 = vpack.c.b16 %v538, %v536
    %v615 = vpack.c.b16 %v539, %v537
    %v616 = vpack.c.b16 %v542, %v540
    %v617 = vpack.c.b16 %v543, %v541
    %v618 = vpack.c.b16 %v546, %v544
    %v619 = vpack.c.b16 %v547, %v545
    %v620 = vpack.c.b16 %v550, %v548
    %v621 = vpack.c.b16 %v551, %v549
    %v622 = vpack.c.b16 %v554, %v552
    %v623 = vpack.c.b16 %v555, %v553
    %v624 = vpack.c.b16 %v558, %v556
    %v625 = vpack.c.b16 %v559, %v557
    %v626 = vpack.c.b16 %v562, %v560
    %v627 = vpack.c.b16 %v563, %v561
    %692 = vmatprep.subr.bf16.mxu0 %v579
    %693 = vmatpush1.bf16.msra.mxu0 %v578
    %694 = vmatprep.subr.bf16.mxu0 %v577
    %695 = vmatpush1.bf16.msra.mxu0 %v576
    %696 = vmatprep.subr.bf16.mxu0 %v575
    %697 = vmatpush1.bf16.msra.mxu0 %v574
    %698 = vmatprep.subr.bf16.mxu0 %v573
    %699 = vmatpush1.bf16.msra.mxu0 %v572
    %700 = vmatprep.subr.bf16.mxu0 %v571
    %701 = vmatpush1.bf16.msra.mxu0 %v570
    %702 = vmatprep.subr.bf16.mxu0 %v569
    %703 = vmatpush1.bf16.msra.mxu0 %v568
    %704 = vmatprep.subr.bf16.mxu0 %v567
    %705 = vmatpush1.bf16.msra.mxu0 %v566
    %706 = vmatprep.subr.bf16.mxu0 %v565
    %707 = vmatpush1.bf16.msra.mxu0 %v564
    %708 = vmatprep.subr.bf16.mxu0 %v595
    %709 = vmatpush2.bf16.msra.mxu0 %v594
    %710 = vmatprep.subr.bf16.mxu0 %v593
    %711 = vmatpush2.bf16.msra.mxu0 %v592
    %712 = vmatprep.subr.bf16.mxu0 %v591
    %713 = vmatpush2.bf16.msra.mxu0 %v590
    %714 = vmatprep.subr.bf16.mxu0 %v589
    %715 = vmatpush2.bf16.msra.mxu0 %v588
    %716 = vmatprep.subr.bf16.mxu0 %v587
    %717 = vmatpush2.bf16.msra.mxu0 %v586
    %718 = vmatprep.subr.bf16.mxu0 %v585
    %719 = vmatpush2.bf16.msra.mxu0 %v584
    %720 = vmatprep.subr.bf16.mxu0 %v583
    %721 = vmatpush2.bf16.msra.mxu0 %v582
    %722 = vmatprep.subr.bf16.mxu0 %v581
    %723 = vmatpush2.bf16.msra.mxu0 %v580
    %724 = vmatprep.mubr.bf16.mxu0 %v293
    %725 = vmatmul.mubr.bf16.gmra.mxu0 %v292
    %v726 = vpop.f32.mrf.mxu0
    %v727 = vadd.f32 %v365, %v726
    %v728 = vpop.f32.mrf.mxu0
    %v729 = vadd.f32 %v369, %v728
    %v730 = vpop.f32.mrf.mxu0
    %v731 = vpop.f32.mrf.mxu0
    %732 = vdwg.mxu0
    %733 = vmatprep.subr.bf16.mxu0 %v611
    %734 = vmatpush1.bf16.msra.mxu0 %v610
    %735 = vmatprep.subr.bf16.mxu0 %v609
    %736 = vmatpush1.bf16.msra.mxu0 %v608
    %737 = vmatprep.subr.bf16.mxu0 %v607
    %738 = vmatpush1.bf16.msra.mxu0 %v606
    %739 = vmatprep.subr.bf16.mxu0 %v605
    %740 = vmatpush1.bf16.msra.mxu0 %v604
    %741 = vmatprep.subr.bf16.mxu0 %v603
    %742 = vmatpush1.bf16.msra.mxu0 %v602
    %743 = vmatprep.subr.bf16.mxu0 %v601
    %744 = vmatpush1.bf16.msra.mxu0 %v600
    %745 = vmatprep.subr.bf16.mxu0 %v599
    %746 = vmatpush1.bf16.msra.mxu0 %v598
    %747 = vmatprep.subr.bf16.mxu0 %v597
    %748 = vmatpush1.bf16.msra.mxu0 %v596
    %749 = vmatprep.subr.bf16.mxu0 %v627
    %750 = vmatpush2.bf16.msra.mxu0 %v626
    %751 = vmatprep.subr.bf16.mxu0 %v625
    %752 = vmatpush2.bf16.msra.mxu0 %v624
    %753 = vmatprep.subr.bf16.mxu0 %v623
    %754 = vmatpush2.bf16.msra.mxu0 %v622
    %755 = vmatprep.subr.bf16.mxu0 %v621
    %756 = vmatpush2.bf16.msra.mxu0 %v620
    %757 = vmatprep.subr.bf16.mxu0 %v619
    %758 = vmatpush2.bf16.msra.mxu0 %v618
    %759 = vmatprep.subr.bf16.mxu0 %v617
    %760 = vmatpush2.bf16.msra.mxu0 %v616
    %761 = vmatprep.subr.bf16.mxu0 %v615
    %762 = vmatpush2.bf16.msra.mxu0 %v614
    %763 = vmatprep.subr.bf16.mxu0 %v613
    %764 = vmatpush2.bf16.msra.mxu0 %v612
    %765 = vmatprep.mubr.bf16.mxu0 %v295
    %766 = vmatmul.mubr.bf16.gmra.mxu0 %v294
    %v767 = vpop.f32.mrf.mxu0
    %v768 = vadd.f32 %v727, %v767
    %v769 = vpop.f32.mrf.mxu0
    %v770 = vadd.f32 %v729, %v769
    %v771 = vpop.f32.mrf.mxu0
    %v772 = vpop.f32.mrf.mxu0
    %773 = vdwg.mxu0
    %v774 = vmul.f32 %v768, 0.5
    %v775 = vmul.f32 %v770, 0.5
    %v776 = vtanh.pop %v774
    %v777 = vtanh.pop %v775
    %v778 = vmul.f32 %v776, 0.5
    %v779 = vmul.f32 %v777, 0.5
    %v780 = vadd.f32 %v778, 0.5
    %v781 = vadd.f32 %v779, 0.5
    %v782 = vld [vmem:[%s8] sm:$0x3]
    %v784 = vlaneseq
    %v785 = vshrl.u32 %v784, 7
    %v786 = vsub.s32 0, %v785
    %v787 = vrot.slane %v782, %v786
    %v788 = vlaneseq
    %v789 = vshrl.u32 %v788, 7
    %v790 = vsub.s32 1, %v789
    %v791 = vrot.slane %v782, %v790
    %v794 = vmul.f32 %v780, %v787
    %v795 = vmul.f32 %v781, %v791
    %v796 = vadd.f32 %v794, %v795
    %797 = vadd.xlane.f32.xlu0 %v796
    %v798 = vpop.xlane.xlu0 %797
    %v799 = vld [vmem:[#allocation2] sm:$0x1]
    %v801 = vlaneseq
    %v802 = vshrl.u32 %v801, 7
    %v803 = vsub.s32 0, %v802
    %v804 = vrot.slane %v799, %v803
    %v806 = vadd.f32 %v798, %v804
    %v807 = vxor.u32 %v806, 2147483648
    %v808 = vmul.f32 %v807, 1.442695
    %v809 = vpow.pop %v808
    %v810 = vadd.f32 %v809, 1.0
    %v811 = vrcp.pop %v810
    %v812 = vmul.f32 1.0, %v811
    %vm813 = vcmask 7168
    %814 = vst.msk [vmem:[%s10] sm:$0xff] %vm813, %v812
    // Predicated region
    $region58: #{tpu_custom_call.1} parent=1 // pred_check
      _
    $region59: #{tpu_custom_call.1} parent=1 // pred_check_branch
      %816 = sbr.rel (0) target = $region61
    $region60: #{tpu_custom_call.1} parent=1 // pred_region
      _
    $region61: #{tpu_custom_call.1} parent=1 // pred_fallthru
      _
    // Predicated region
    $region62: #{tpu_custom_call.1} parent=1 // pred_check
      _
    $region63: #{tpu_custom_call.1} parent=1 // pred_check_branch
      %818 = sbr.rel (0) target = $region65
    $region64: #{tpu_custom_call.1} parent=1 // pred_region
      _
    $region65: #{tpu_custom_call.1} parent=1 // pred_fallthru
      _
    %819 = vsyncpa [#allocation4], 1
    %820 = vsyncpa [#allocation6], 1
    %821 = vsyncpa [#allocation9], 1

</llo_original>
